<compile_context>
chip_gen: v6e
topology: v6e:2x2x1
jax: 0.10.0
libtpu: 0.0.40
codegen_flags: <defaults>
</compile_context>

<pallas_src>
import functools

import jax
import jax.numpy as jnp
from jax.experimental import pallas as pl
from jax.experimental.pallas import tpu as pltpu


def _psnr_partial_kernel(x_ref, y_ref, ss_out, mx_out, mn_out,
                         ss_acc, mx_acc, mn_acc, *, d_sub, td, needs_mask):
    """Per-row partial reductions over the D axis.

    x_ref / y_ref : (TB, TD) tiles in VMEM (native dtype, upcast here).
    ss_out/mx_out/mn_out : (TB, 1) per-row sum-of-squared-error / max / min of X,
                           written once at the last D-step.
    ss_acc/mx_acc/mn_acc : (TB, 1) f32 accumulators, persistent across the D axis.
    """
    k = pl.program_id(1)

    @pl.when(k == 0)
    def _init():
        ss_acc[...] = jnp.zeros(ss_acc.shape, ss_acc.dtype)
        mx_acc[...] = jnp.full(mx_acc.shape, -jnp.inf, dtype=mx_acc.dtype)
        mn_acc[...] = jnp.full(mn_acc.shape, jnp.inf, dtype=mn_acc.dtype)

    # Upcast only after the tile is already in VMEM (HBM reads stay narrow).
    x = x_ref[...].astype(jnp.float32)
    y = y_ref[...].astype(jnp.float32)
    diff = x - y

    if needs_mask:
        # Ragged last D-block: lanes past the true width contribute 0 to the
        # squared error and -inf/+inf to max/min.  (No-op columns on full blocks.)
        col = k * td + jax.lax.broadcasted_iota(jnp.int32, x.shape, 1)
        valid = col < d_sub
        diff = jnp.where(valid, diff, 0.0)
        x_mx = jnp.where(valid, x, -jnp.inf)
        x_mn = jnp.where(valid, x, jnp.inf)
    else:
        x_mx = x
        x_mn = x

    # Within-tile reduce is a tree of VPU vreg adds + one cross-lane reduce per tile;
    # with MiB-scale tiles the XLU cost is negligible relative to the DMA.
    ss_acc[...] += jnp.sum(diff * diff, axis=1, keepdims=True)
    mx_acc[...] = jnp.maximum(mx_acc[...], jnp.max(x_mx, axis=1, keepdims=True))
    mn_acc[...] = jnp.minimum(mn_acc[...], jnp.min(x_mn, axis=1, keepdims=True))

    @pl.when(k == pl.num_programs(1) - 1)
    def _finalize():
        ss_out[...] = ss_acc[...]
        mx_out[...] = mx_acc[...]
        mn_out[...] = mn_acc[...]


def psnr_pallas(X, Y, reduction: str = "mean", *, tile_budget_bytes=2 * 1024 * 1024):
    """Pallas implementation of the PSNR module forward.

    Args:
        X: prediction, shape (B, C, H, W)   (any trailing shape works)
        Y: ground truth, same shape as X
        reduction: 'mean' | 'sum' | anything else -> per-sample (B,) vector
        tile_budget_bytes: ~f32 footprint per input tile (tuning knob / test hook)
    """
    assert X.shape == Y.shape
    B = X.shape[0]
    D = 1
    for s in X.shape[1:]:
        D *= s

    # --- sublane fold: view (B, D) as (B*R, D/R) so sublanes are full when B is small
    R = 1
    if B < 16:
        for cand in (8, 4, 2):
            if D % cand == 0 and (B * cand) % 8 == 0:
                R = cand
                break
    rows = B * R
    d_sub = D // R

    Xr = jnp.reshape(X, (rows, d_sub))   # pure reshape of contiguous data, no copy
    Yr = jnp.reshape(Y, (rows, d_sub))

    # --- row (sublane) tile: fill packed sublanes for the input dtype when possible
    packing = max(1, 4 // jnp.dtype(Xr.dtype).itemsize)   # f32:1, bf16:2, int8/fp8:4
    sub = 8 * packing
    if rows % sub == 0 and rows // sub >= 2:
        TB = sub
    elif rows % 8 == 0:
        TB = 8
    else:
        TB = rows            # full-extent fallback (small / odd batch)

    # --- lane tile: sized so the f32 (upcast) footprint of one input tile ~= budget
    td_max = max(128, (tile_budget_bytes // (TB * 4)) // 128 * 128)
    if d_sub <= td_max:
        TD = d_sub           # single D block: full-extent last dim, no 128 constraint
        needs_mask = False
    else:
        # Prefer a 128-multiple that divides d_sub (no masking, no ragged block).
        TD = 0
        for m in range(td_max // 128, 0, -1):
            c = m * 128
            if d_sub % c == 0:
                TD = c
                break
        if TD >= max(128, td_max // 4):
            needs_mask = False
        else:
            TD = td_max
            needs_mask = (d_sub % TD) != 0
    num_k = -(-d_sub // TD)

    grid = (rows // TB, num_k)

    # --- VMEM limit from the actual footprint (double-buffered inputs + f32 temporaries),
    #     capped so it is safe on v7x's 64 MiB VMEM per TensorCore.
    in_tile_bytes = TB * TD * (jnp.dtype(Xr.dtype).itemsize + jnp.dtype(Yr.dtype).itemsize)
    f32_tile_bytes = TB * TD * 4
    vmem_limit = int(min(48 * 1024 * 1024,
                         max(16 * 1024 * 1024,
                             2 * in_tile_bytes + 8 * f32_tile_bytes + (2 << 20))))

    grid_spec = pltpu.PrefetchScalarGridSpec(
        num_scalar_prefetch=0,
        grid=grid,
        in_specs=[
            pl.BlockSpec((TB, TD), lambda i, k: (i, k)),
            pl.BlockSpec((TB, TD), lambda i, k: (i, k)),
        ],
        out_specs=[
            pl.BlockSpec((TB, 1), lambda i, k: (i, 0)),
            pl.BlockSpec((TB, 1), lambda i, k: (i, 0)),
            pl.BlockSpec((TB, 1), lambda i, k: (i, 0)),
        ],
        scratch_shapes=[
            pltpu.VMEM((TB, 1), jnp.float32),   # sum of squared error
            pltpu.VMEM((TB, 1), jnp.float32),   # running max of prediction
            pltpu.VMEM((TB, 1), jnp.float32),   # running min of prediction
        ],
    )

    ss, mx, mn = pl.pallas_call(
        functools.partial(_psnr_partial_kernel, d_sub=d_sub, td=TD, needs_mask=needs_mask),
        out_shape=(
            jax.ShapeDtypeStruct((rows, 1), jnp.float32),
            jax.ShapeDtypeStruct((rows, 1), jnp.float32),
            jax.ShapeDtypeStruct((rows, 1), jnp.float32),
        ),
        grid_spec=grid_spec,
        compiler_params=pltpu.CompilerParams(
            dimension_semantics=("parallel", "arbitrary"),
            vmem_limit_bytes=vmem_limit,
        ),
    )(Xr, Yr)

    # --- cheap per-sample combine of the R sub-row partials + log10 finalize (JAX glue)
    ss = jnp.sum(jnp.reshape(ss[:, 0], (B, R)), axis=1)
    mx = jnp.max(jnp.reshape(mx[:, 0], (B, R)), axis=1)
    mn = jnp.min(jnp.reshape(mn[:, 0], (B, R)), axis=1)

    mse = ss / D
    psnr = 20.0 * jnp.log10(mx - mn) - 10.0 * jnp.log10(mse)

    if reduction == "mean":
        return jnp.mean(psnr)
    elif reduction == "sum":
        return jnp.sum(psnr)
    return psnr


def _psnr_ref(X, Y, reduction: str = "mean"):
    # pure-JAX reference mirroring the PyTorch module
    B = X.shape[0]
    pred = jnp.reshape(X, (B, -1)).astype(jnp.float32)
    gt = jnp.reshape(Y, (B, -1)).astype(jnp.float32)
    mse = jnp.mean((pred - gt) ** 2, axis=1)
    psnr = 20.0 * jnp.log10(jnp.max(pred, axis=1) - jnp.min(pred, axis=1)) \
        - 10.0 * jnp.log10(mse)
    if reduction == "mean":
        return jnp.mean(psnr)
    elif reduction == "sum":
        return jnp.sum(psnr)
    return psnr


if __name__ == "__main__":
    key = jax.random.PRNGKey(0)
    kx, ky, kx2, ky2 = jax.random.split(key, 4)

    # Primary case: NCHW input as the module expects.
    B, C, H, W = 2, 4, 16, 16
    X = jax.random.uniform(kx, (B, C, H, W), dtype=jnp.float32)
    Y = X + 0.05 * jax.random.normal(ky, (B, C, H, W), dtype=jnp.float32)

    out_mean = jax.block_until_ready(psnr_pallas(X, Y, reduction="mean"))
    out_sum = jax.block_until_ready(psnr_pallas(X, Y, reduction="sum"))
    out_none = jax.block_until_ready(psnr_pallas(X, Y, reduction="none"))

    assert jnp.allclose(out_mean, _psnr_ref(X, Y, "mean"), rtol=1e-5, atol=1e-5)
    assert jnp.allclose(out_sum, _psnr_ref(X, Y, "sum"), rtol=1e-5, atol=1e-5)
    assert jnp.allclose(out_none, _psnr_ref(X, Y, "none"), rtol=1e-5, atol=1e-5)

    # Ragged / masked-last-block path: D=390 (not a multiple of 128) with a tiny
    # tile budget so the D axis splits into multiple steps with an overhanging block.
    B2, C2, H2, W2 = 2, 3, 10, 13
    X2 = jax.random.uniform(kx2, (B2, C2, H2, W2), dtype=jnp.float32)
    Y2 = X2 + 0.1 * jax.random.normal(ky2, (B2, C2, H2, W2), dtype=jnp.float32)
    out2 = jax.block_until_ready(
        psnr_pallas(X2, Y2, reduction="none", tile_budget_bytes=2048))
    assert jnp.allclose(out2, _psnr_ref(X2, Y2, "none"), rtol=1e-5, atol=1e-5)

    print("KERNEL_OK")
</pallas_src>

<mosaic_0001>
module attributes {stable_mosaic.version = 11 : i64} {
  func.func @_psnr_partial_kernel(%arg0: i32, %arg1: i32, %arg2: memref<8x128xf32, #tpu.memory_space<vmem>>, %arg3: memref<8x128xf32, #tpu.memory_space<vmem>>, %arg4: memref<8x1xf32, #tpu.memory_space<vmem>>, %arg5: memref<8x1xf32, #tpu.memory_space<vmem>>, %arg6: memref<8x1xf32, #tpu.memory_space<vmem>>, %arg7: memref<8x1xf32, #tpu.memory_space<vmem>>, %arg8: memref<8x1xf32, #tpu.memory_space<vmem>>, %arg9: memref<8x1xf32, #tpu.memory_space<vmem>>) attributes {dimension_semantics = [#tpu.dimension_semantics<parallel>, #tpu.dimension_semantics<arbitrary>], iteration_bounds = array<i64: 2, 1>, scalar_prefetch = 0 : i64, scratch_operands = 3 : i64, tpu.core_type = #tpu.core_type<tc>, window_params = [{transform_indices = @transform_0, window_bounds = array<i64: 8, 128>}, {transform_indices = @transform_1, window_bounds = array<i64: 8, 128>}, {transform_indices = @transform_2, window_bounds = array<i64: 8, 1>}, {transform_indices = @transform_3, window_bounds = array<i64: 8, 1>}, {transform_indices = @transform_4, window_bounds = array<i64: 8, 1>}]} {
    %c0_i32 = arith.constant 0 : i32
    %0 = arith.cmpi eq, %arg1, %c0_i32 : i32
    %1 = arith.extui %0 : i1 to i32
    %c0_i32_0 = arith.constant 0 : i32
    %2 = arith.cmpi ne, %1, %c0_i32_0 : i32
    scf.if %2 {
      %cst_20 = arith.constant 0.000000e+00 : f32
      %25 = vector.broadcast %cst_20 : f32 to vector<8x1xf32>
      %c0_21 = arith.constant 0 : index
      %c0_22 = arith.constant 0 : index
      %26 = vector.load %arg7[%c0_21, %c0_22] : memref<8x1xf32, #tpu.memory_space<vmem>>, vector<8x1xf32>
      tpu.vector_store %arg7[%c0_21, %c0_22], %25 {strides = array<i32>} : memref<8x1xf32, #tpu.memory_space<vmem>>, vector<8x1xf32>,
      %cst_23 = arith.constant 0xFF800000 : f32
      %27 = vector.broadcast %cst_23 : f32 to vector<8x1xf32>
      %c0_24 = arith.constant 0 : index
      %c0_25 = arith.constant 0 : index
      %28 = vector.load %arg8[%c0_24, %c0_25] : memref<8x1xf32, #tpu.memory_space<vmem>>, vector<8x1xf32>
      tpu.vector_store %arg8[%c0_24, %c0_25], %27 {strides = array<i32>} : memref<8x1xf32, #tpu.memory_space<vmem>>, vector<8x1xf32>,
      %cst_26 = arith.constant 0x7F800000 : f32
      %29 = vector.broadcast %cst_26 : f32 to vector<8x1xf32>
      %c0_27 = arith.constant 0 : index
      %c0_28 = arith.constant 0 : index
      %30 = vector.load %arg9[%c0_27, %c0_28] : memref<8x1xf32, #tpu.memory_space<vmem>>, vector<8x1xf32>
      tpu.vector_store %arg9[%c0_27, %c0_28], %29 {strides = array<i32>} : memref<8x1xf32, #tpu.memory_space<vmem>>, vector<8x1xf32>,
    } else {
    }
    %c0 = arith.constant 0 : index
    %c0_1 = arith.constant 0 : index
    %3 = vector.load %arg2[%c0, %c0_1] : memref<8x128xf32, #tpu.memory_space<vmem>>, vector<8x128xf32>
    %c0_2 = arith.constant 0 : index
    %c0_3 = arith.constant 0 : index
    %4 = vector.load %arg3[%c0_2, %c0_3] : memref<8x128xf32, #tpu.memory_space<vmem>>, vector<8x128xf32>
    %5 = arith.subf %3, %4 : vector<8x128xf32>
    %c0_4 = arith.constant 0 : index
    %c0_5 = arith.constant 0 : index
    %6 = vector.load %arg7[%c0_4, %c0_5] : memref<8x1xf32, #tpu.memory_space<vmem>>, vector<8x1xf32>
    %7 = arith.mulf %5, %5 : vector<8x128xf32>
    %cst = arith.constant dense<0.000000e+00> : vector<8xf32>
    %8 = vector.multi_reduction <add>, %7, %cst [1] : vector<8x128xf32> to vector<8xf32>
    %9 = vector.shape_cast %8 : vector<8xf32> to vector<8x1xf32>
    %10 = arith.addf %6, %9 : vector<8x1xf32>
    %c0_6 = arith.constant 0 : index
    %c0_7 = arith.constant 0 : index
    %11 = vector.load %arg7[%c0_6, %c0_7] : memref<8x1xf32, #tpu.memory_space<vmem>>, vector<8x1xf32>
    tpu.vector_store %arg7[%c0_6, %c0_7], %10 {strides = array<i32>} : memref<8x1xf32, #tpu.memory_space<vmem>>, vector<8x1xf32>,
    %c0_8 = arith.constant 0 : index
    %c0_9 = arith.constant 0 : index
    %12 = vector.load %arg8[%c0_8, %c0_9] : memref<8x1xf32, #tpu.memory_space<vmem>>, vector<8x1xf32>
    %cst_10 = arith.constant dense<0xFF800000> : vector<8xf32>
    %13 = vector.multi_reduction <maximumf>, %3, %cst_10 [1] : vector<8x128xf32> to vector<8xf32>
    %14 = vector.shape_cast %13 : vector<8xf32> to vector<8x1xf32>
    %15 = arith.maximumf %12, %14 : vector<8x1xf32>
    %c0_11 = arith.constant 0 : index
    %c0_12 = arith.constant 0 : index
    %16 = vector.load %arg8[%c0_11, %c0_12] : memref<8x1xf32, #tpu.memory_space<vmem>>, vector<8x1xf32>
    tpu.vector_store %arg8[%c0_11, %c0_12], %15 {strides = array<i32>} : memref<8x1xf32, #tpu.memory_space<vmem>>, vector<8x1xf32>,
    %c0_13 = arith.constant 0 : index
    %c0_14 = arith.constant 0 : index
    %17 = vector.load %arg9[%c0_13, %c0_14] : memref<8x1xf32, #tpu.memory_space<vmem>>, vector<8x1xf32>
    %cst_15 = arith.constant dense<0x7F800000> : vector<8xf32>
    %18 = vector.multi_reduction <minimumf>, %3, %cst_15 [1] : vector<8x128xf32> to vector<8xf32>
    %19 = vector.shape_cast %18 : vector<8xf32> to vector<8x1xf32>
    %20 = arith.minimumf %17, %19 : vector<8x1xf32>
    %c0_16 = arith.constant 0 : index
    %c0_17 = arith.constant 0 : index
    %21 = vector.load %arg9[%c0_16, %c0_17] : memref<8x1xf32, #tpu.memory_space<vmem>>, vector<8x1xf32>
    tpu.vector_store %arg9[%c0_16, %c0_17], %20 {strides = array<i32>} : memref<8x1xf32, #tpu.memory_space<vmem>>, vector<8x1xf32>,
    %c0_i32_18 = arith.constant 0 : i32
    %22 = arith.cmpi eq, %arg1, %c0_i32_18 : i32
    %23 = arith.extui %22 : i1 to i32
    %c0_i32_19 = arith.constant 0 : i32
    %24 = arith.cmpi ne, %23, %c0_i32_19 : i32
    scf.if %24 {
      %c0_20 = arith.constant 0 : index
      %c0_21 = arith.constant 0 : index
      %25 = vector.load %arg7[%c0_20, %c0_21] : memref<8x1xf32, #tpu.memory_space<vmem>>, vector<8x1xf32>
      %c0_22 = arith.constant 0 : index
      %c0_23 = arith.constant 0 : index
      %26 = vector.load %arg4[%c0_22, %c0_23] : memref<8x1xf32, #tpu.memory_space<vmem>>, vector<8x1xf32>
      tpu.vector_store %arg4[%c0_22, %c0_23], %25 {strides = array<i32>} : memref<8x1xf32, #tpu.memory_space<vmem>>, vector<8x1xf32>,
      %c0_24 = arith.constant 0 : index
      %c0_25 = arith.constant 0 : index
      %27 = vector.load %arg8[%c0_24, %c0_25] : memref<8x1xf32, #tpu.memory_space<vmem>>, vector<8x1xf32>
      %c0_26 = arith.constant 0 : index
      %c0_27 = arith.constant 0 : index
      %28 = vector.load %arg5[%c0_26, %c0_27] : memref<8x1xf32, #tpu.memory_space<vmem>>, vector<8x1xf32>
      tpu.vector_store %arg5[%c0_26, %c0_27], %27 {strides = array<i32>} : memref<8x1xf32, #tpu.memory_space<vmem>>, vector<8x1xf32>,
      %c0_28 = arith.constant 0 : index
      %c0_29 = arith.constant 0 : index
      %29 = vector.load %arg9[%c0_28, %c0_29] : memref<8x1xf32, #tpu.memory_space<vmem>>, vector<8x1xf32>
      %c0_30 = arith.constant 0 : index
      %c0_31 = arith.constant 0 : index
      %30 = vector.load %arg6[%c0_30, %c0_31] : memref<8x1xf32, #tpu.memory_space<vmem>>, vector<8x1xf32>
      tpu.vector_store %arg6[%c0_30, %c0_31], %29 {strides = array<i32>} : memref<8x1xf32, #tpu.memory_space<vmem>>, vector<8x1xf32>,
    } else {
    }
    return
  }
  func.func @transform_0(%arg0: i32, %arg1: i32) -> (i32, i32) {
    %c0_i32 = arith.constant 0 : i32
    return %arg0, %arg1 : i32, i32
  }
  func.func @transform_1(%arg0: i32, %arg1: i32) -> (i32, i32) {
    %c0_i32 = arith.constant 0 : i32
    return %arg0, %arg1 : i32, i32
  }
  func.func @transform_2(%arg0: i32, %arg1: i32) -> (i32, i32) {
    %c0_i32 = arith.constant 0 : i32
    %c0_i32_0 = arith.constant 0 : i32
    return %arg0, %c0_i32 : i32, i32
  }
  func.func @transform_3(%arg0: i32, %arg1: i32) -> (i32, i32) {
    %c0_i32 = arith.constant 0 : i32
    %c0_i32_0 = arith.constant 0 : i32
    return %arg0, %c0_i32 : i32, i32
  }
  func.func @transform_4(%arg0: i32, %arg1: i32) -> (i32, i32) {
    %c0_i32 = arith.constant 0 : i32
    %c0_i32_0 = arith.constant 0 : i32
    return %arg0, %c0_i32 : i32, i32
  }
}

</mosaic_0001>

<llo_original>
// kernel: tpu_custom_call.1
$region0: #{tpu_custom_call.1}
  #allocation0 [shape = 'u32[]', space=smem, size = 0x4, offset = 0x4, fixed_abs, tag = 'smem constant byte address 0x4 - core index']
  #allocation1 [shape = 'u32[144,128]{1,0:T(1,128)}', space=vmem, size = 0x12000, scoped, tag = 'internal scratch']
  #allocation2 [shape = 'f32[8,1]{1,0:T(8,128)}', space=vmem, size = 0x1000, scoped, tag = 'scratch operand']
  #allocation3 [shape = 'f32[8,1]{1,0:T(8,128)}', space=vmem, size = 0x1000, scoped, tag = 'scratch operand']
  #allocation4 [shape = 'f32[8,1]{1,0:T(8,128)}', space=vmem, size = 0x1000, scoped, tag = 'scratch operand']
  %s0 = inlined_call_operand.hbm [shape: f32[16,128], index: 0, kind: input, shape index: {}]
  %s1 = inlined_call_operand.hbm [shape: f32[16,128], index: 1, kind: input, shape index: {}]
  %s2 = inlined_call_operand.vmem [shape: f32[16,1], index: 2, kind: output, shape index: {0}]
  %s3 = inlined_call_operand.vmem [shape: f32[16,1], index: 3, kind: output, shape index: {1}]
  %s4 = inlined_call_operand.vmem [shape: f32[16,1], index: 4, kind: output, shape index: {2}]
  %5 = xla_tuple %s2, %s3, %s4
  %s6 = sld [smem:[#allocation0]]
  $region73: #{tpu_custom_call.1} parent=0
    _
  %s8 = ssub.s32 1, %s6
  %s9 = scalar_select 0, %s8, %s6
  $region1: #{tpu_custom_call.1} parent=0
    #allocation5 [shape = 'u8[8192]{0}', space=vmem, size = 0x2000, scoped, tag = 'input window, operand 0']
    #allocation6 [shape = 's32[2]{0}', space=sflag, size = 0x8, scoped, tag = 'scoped memory for tpu_custom_call.1']
    #allocation7 [shape = 'u8[8192]{0}', space=vmem, size = 0x2000, scoped, tag = 'input window, operand 1']
    #allocation8 [shape = 's32[2]{0}', space=sflag, size = 0x8, scoped, tag = 'scoped memory for tpu_custom_call.1']
    %10 = vsyncpa [#allocation6], 0
    %s11 = scalar_lea.sflag [#allocation6], 1
    %12 = vsyncpa %s11, 0
    %13 = vsyncpa [#allocation8], 0
    %s14 = scalar_lea.sflag [#allocation8], 1
    %15 = vsyncpa %s14, 0
    loop: start=0, step=1, limit=4
    $region2: #{tpu_custom_call.1} parent=1 // loop_pre_header
      _
    $region3: #{tpu_custom_call.1} parent=1 // loop_header
      %s17 = sphi 0, %s21
      %p18 = scmp.ge.s32.totalorder %s17, 4
      %s24 = sphi 0, %s36
      %s25 = sphi 0, %s32
      %s26 = sphi 0, %s24
      %s27 = sphi 0, %s25
      %s28 = sphi 0, %s26
      %s29 = sphi 0, %s27
      %s41 = sphi 0, %s43
      %s44 = sphi 0, %s41
      %s45 = sphi 0, %s44
      %s61 = sphi 0, %s45
      %s69 = sphi 0, %s71
      %s72 = sphi 0, %s69
      %s73 = sphi 0, %s72
      %s89 = sphi 0, %s73
      %s95 = sphi 0, %s97
      %s98 = sphi 0, %s95
      %s99 = sphi 0, %s98
      %s115 = sphi 0, %s99
      %s121 = sphi 0, %s123
      %s124 = sphi 0, %s121
      %s125 = sphi 0, %s124
      %s141 = sphi 0, %s125
      %s147 = sphi 0, %s149
      %s150 = sphi 0, %s147
      %s151 = sphi 0, %s150
      %s167 = sphi 0, %s151
    $region4: #{tpu_custom_call.1} parent=1 // loop_header_branch
      %20 = sbr.rel (%p18) target = $region8
    $region5: #{tpu_custom_call.1} parent=1 // loop_body
      %s22 = ssub.s32 %s17, 1
      %s23 = ssub.s32 %s17, 2
      %s30 = sadd.s32 1, %s25
      %p31 = scmp.ge.s32.totalorder %s30, 1
      %s32 = scalar_select %p31, 0, %s30
      %s33 = sadd.s32 1, %s24
      %s34 = scalar_select %p31, %s33, %s24
      %p35 = scmp.ge.s32.totalorder %s34, 2
      %s36 = scalar_select %p35, 0, %s34
      %s37 = ssub.s32 %s24, %s36
      %s38 = ssub.s32 %s25, %s32
      %s39 = sor.u32 %s37, %s38
      %p40 = scmp.eq.s32.totalorder %s39, 0
      %s42 = sadd.s32 %s41, 1
      %s43 = scalar_select %p40, %s41, %s42
      %p46 = pneg %p40
      %p47 = scmp.eq.s32.totalorder %s17, 1
      %p48 = por %p46, %p47
      %p49 = scmp.ne.s32.totalorder %s41, %s44
      %p50 = scmp.eq.s32.totalorder %s17, 0
      %p51 = por %p49, %p50
      %p52 = scmp.ne.s32.totalorder %s41, %s44
      %p53 = scmp.eq.s32.totalorder %s22, 1
      %p54 = por %p52, %p53
      %p55 = scmp.ne.s32.totalorder %s44, %s45
      %p56 = scmp.eq.s32.totalorder %s22, 0
      %p57 = por %p55, %p56
      %p58 = scmp.ne.s32.totalorder %s44, %s45
      %p59 = scmp.eq.s32.totalorder %s23, 1
      %p60 = por %p58, %p59
      %p62 = scmp.ne.s32.totalorder %s45, %s61
      %p63 = scmp.eq.s32.totalorder %s23, 0
      %p64 = por %p62, %p63
      %s65 = ssub.s32 %s24, %s36
      %s66 = ssub.s32 %s25, %s32
      %s67 = sor.u32 %s65, %s66
      %p68 = scmp.eq.s32.totalorder %s67, 0
      %s70 = sadd.s32 %s69, 1
      %s71 = scalar_select %p68, %s69, %s70
      %p74 = pneg %p68
      %p75 = scmp.eq.s32.totalorder %s17, 1
      %p76 = por %p74, %p75
      %p77 = scmp.ne.s32.totalorder %s69, %s72
      %p78 = scmp.eq.s32.totalorder %s17, 0
      %p79 = por %p77, %p78
      %p80 = scmp.ne.s32.totalorder %s69, %s72
      %p81 = scmp.eq.s32.totalorder %s22, 1
      %p82 = por %p80, %p81
      %p83 = scmp.ne.s32.totalorder %s72, %s73
      %p84 = scmp.eq.s32.totalorder %s22, 0
      %p85 = por %p83, %p84
      %p86 = scmp.ne.s32.totalorder %s72, %s73
      %p87 = scmp.eq.s32.totalorder %s23, 1
      %p88 = por %p86, %p87
      %p90 = scmp.ne.s32.totalorder %s73, %s89
      %p91 = scmp.eq.s32.totalorder %s23, 0
      %p92 = por %p90, %p91
      %s93 = ssub.s32 %s24, %s36
      %p94 = scmp.eq.s32.totalorder %s93, 0
      %s96 = sadd.s32 %s95, 1
      %s97 = scalar_select %p94, %s95, %s96
      %p100 = pneg %p94
      %p101 = scmp.eq.s32.totalorder %s17, 1
      %p102 = por %p100, %p101
      %p103 = scmp.ne.s32.totalorder %s95, %s98
      %p104 = scmp.eq.s32.totalorder %s17, 0
      %p105 = por %p103, %p104
      %p106 = scmp.ne.s32.totalorder %s95, %s98
      %p107 = scmp.eq.s32.totalorder %s22, 1
      %p108 = por %p106, %p107
      %p109 = scmp.ne.s32.totalorder %s98, %s99
      %p110 = scmp.eq.s32.totalorder %s22, 0
      %p111 = por %p109, %p110
      %p112 = scmp.ne.s32.totalorder %s98, %s99
      %p113 = scmp.eq.s32.totalorder %s23, 1
      %p114 = por %p112, %p113
      %p116 = scmp.ne.s32.totalorder %s99, %s115
      %p117 = scmp.eq.s32.totalorder %s23, 0
      %p118 = por %p116, %p117
      %s119 = ssub.s32 %s24, %s36
      %p120 = scmp.eq.s32.totalorder %s119, 0
      %s122 = sadd.s32 %s121, 1
      %s123 = scalar_select %p120, %s121, %s122
      %p126 = pneg %p120
      %p127 = scmp.eq.s32.totalorder %s17, 1
      %p128 = por %p126, %p127
      %p129 = scmp.ne.s32.totalorder %s121, %s124
      %p130 = scmp.eq.s32.totalorder %s17, 0
      %p131 = por %p129, %p130
      %p132 = scmp.ne.s32.totalorder %s121, %s124
      %p133 = scmp.eq.s32.totalorder %s22, 1
      %p134 = por %p132, %p133
      %p135 = scmp.ne.s32.totalorder %s124, %s125
      %p136 = scmp.eq.s32.totalorder %s22, 0
      %p137 = por %p135, %p136
      %p138 = scmp.ne.s32.totalorder %s124, %s125
      %p139 = scmp.eq.s32.totalorder %s23, 1
      %p140 = por %p138, %p139
      %p142 = scmp.ne.s32.totalorder %s125, %s141
      %p143 = scmp.eq.s32.totalorder %s23, 0
      %p144 = por %p142, %p143
      %s145 = ssub.s32 %s24, %s36
      %p146 = scmp.eq.s32.totalorder %s145, 0
      %s148 = sadd.s32 %s147, 1
      %s149 = scalar_select %p146, %s147, %s148
      %p152 = pneg %p146
      %p153 = scmp.eq.s32.totalorder %s17, 1
      %p154 = por %p152, %p153
      %p155 = scmp.ne.s32.totalorder %s147, %s150
      %p156 = scmp.eq.s32.totalorder %s17, 0
      %p157 = por %p155, %p156
      %p158 = scmp.ne.s32.totalorder %s147, %s150
      %p159 = scmp.eq.s32.totalorder %s22, 1
      %p160 = por %p158, %p159
      %p161 = scmp.ne.s32.totalorder %s150, %s151
      %p162 = scmp.eq.s32.totalorder %s22, 0
      %p163 = por %p161, %p162
      %p164 = scmp.ne.s32.totalorder %s150, %s151
      %p165 = scmp.eq.s32.totalorder %s23, 1
      %p166 = por %p164, %p165
      %p168 = scmp.ne.s32.totalorder %s151, %s167
      %p169 = scmp.eq.s32.totalorder %s23, 0
      %p170 = por %p168, %p169
      %p171 = scmp.le.s32.totalorder 1, %s17
      %p172 = scmp.lt.s32.totalorder %s17, 3
      %p173 = pnand %p171, %p172
      %p174 = pneg %p173
      // Predicated region
      $region9: #{tpu_custom_call.1} parent=5 // pred_check
        _
      $region10: #{tpu_custom_call.1} parent=5 // pred_check_branch
        %176 = sbr.rel (%p173) target = $region12
      $region11: #{tpu_custom_call.1} parent=5 // pred_region
        %s177 = ssub.s32 %s17, 1
      $region12: #{tpu_custom_call.1} parent=5 // pred_fallthru
        _
      %p178 = scmp.lt.s32.totalorder %s17, 2
      // Predicated region
      $region13: #{tpu_custom_call.1} parent=5 // pred_check
        %p179 = pneg %p178
      $region14: #{tpu_custom_call.1} parent=5 // pred_check_branch
        %181 = sbr.rel (%p179) target = $region16
      $region15: #{tpu_custom_call.1} parent=5 // pred_region
        // Predicated region
        $region17: #{tpu_custom_call.1} parent=15 // pred_check
          %p182 = pneg %p51
        $region18: #{tpu_custom_call.1} parent=15 // pred_check_branch
          %184 = sbr.rel (%p182) target = $region20
        $region19: #{tpu_custom_call.1} parent=15 // pred_region
          %s185 = sand.u32 %s41, 1
          %s186 = scalar_lea.sflag [#allocation6], %s185
          %s187 = sand.u32 %s41, 1
          %s188 = smul.addr %s187, 8
          %s189 = scalar_lea.vmem [#allocation5], %s188
          %s191 = ssub.s32 128, 128
          %192 = vsyncadd %s186, %s191
          %s193 = sadd.s32 %s25, %s24
          %s194 = smul.addr %s193, 128
          %s195 = scalar_lea.hbm %s0, %s194
          %s197 = sshll.u32 %s189, 4
          %s198 = int_to_ptr.vmem [resolvable:$true] %s197
          %200 = dma.hbm_to_vmem [thread:$0]  %s195, 128, %s198, %s186
        $region20: #{tpu_custom_call.1} parent=15 // pred_fallthru
          _
        // Predicated region
        $region21: #{tpu_custom_call.1} parent=15 // pred_check
          %p201 = pneg %p79
        $region22: #{tpu_custom_call.1} parent=15 // pred_check_branch
          %203 = sbr.rel (%p201) target = $region24
        $region23: #{tpu_custom_call.1} parent=15 // pred_region
          %s204 = sand.u32 %s69, 1
          %s205 = scalar_lea.sflag [#allocation8], %s204
          %s206 = sand.u32 %s69, 1
          %s207 = smul.addr %s206, 8
          %s208 = scalar_lea.vmem [#allocation7], %s207
          %s210 = ssub.s32 128, 128
          %211 = vsyncadd %s205, %s210
          %s212 = sadd.s32 %s25, %s24
          %s213 = smul.addr %s212, 128
          %s214 = scalar_lea.hbm %s1, %s213
          %s216 = sshll.u32 %s208, 4
          %s217 = int_to_ptr.vmem [resolvable:$true] %s216
          %219 = dma.hbm_to_vmem [thread:$0]  %s214, 128, %s217, %s205
        $region24: #{tpu_custom_call.1} parent=15 // pred_fallthru
          _
      $region16: #{tpu_custom_call.1} parent=5 // pred_fallthru
        _
      %p220 = scmp.le.s32.totalorder 1, %s17
      %p221 = scmp.lt.s32.totalorder %s17, 3
      %p222 = pnand %p220, %p221
      %p223 = pneg %p222
      // Predicated region
      $region25: #{tpu_custom_call.1} parent=5 // pred_check
        _
      $region26: #{tpu_custom_call.1} parent=5 // pred_check_branch
        %225 = sbr.rel (%p222) target = $region28
      $region27: #{tpu_custom_call.1} parent=5 // pred_region
        %s226 = ssub.s32 %s17, 1
        %s227 = sand.u32 %s44, 1
        %s228 = scalar_lea.sflag [#allocation6], %s227
        %s229 = sand.u32 %s44, 1
        %s230 = smul.addr %s229, 8
        %s231 = scalar_lea.vmem [#allocation5], %s230
        // Predicated region
        $region29: #{tpu_custom_call.1} parent=27 // pred_check
          %p232 = pneg %p57
        $region30: #{tpu_custom_call.1} parent=27 // pred_check_branch
          %234 = sbr.rel (%p232) target = $region32
        $region31: #{tpu_custom_call.1} parent=27 // pred_region
          %235 = dma.done %s228, 128
        $region32: #{tpu_custom_call.1} parent=27 // pred_fallthru
          _
        %s236 = sand.u32 %s72, 1
        %s237 = scalar_lea.sflag [#allocation8], %s236
        %s238 = sand.u32 %s72, 1
        %s239 = smul.addr %s238, 8
        %s240 = scalar_lea.vmem [#allocation7], %s239
        // Predicated region
        $region33: #{tpu_custom_call.1} parent=27 // pred_check
          %p241 = pneg %p85
        $region34: #{tpu_custom_call.1} parent=27 // pred_check_branch
          %243 = sbr.rel (%p241) target = $region36
        $region35: #{tpu_custom_call.1} parent=27 // pred_region
          %244 = dma.done %s237, 128
        $region36: #{tpu_custom_call.1} parent=27 // pred_fallthru
          _
        %s245 = sand.u32 %s44, 1
        %s246 = scalar_lea.sflag [#allocation6], %s245
        %s247 = sand.u32 %s44, 1
        %s248 = smul.addr %s247, 8
        %s249 = scalar_lea.vmem [#allocation5], %s248
        %p250 = pneg %p57
        %p251 = pneg %p54
        %s252 = sand.u32 %s72, 1
        %s253 = scalar_lea.sflag [#allocation8], %s252
        %s254 = sand.u32 %s72, 1
        %s255 = smul.addr %s254, 8
        %s256 = scalar_lea.vmem [#allocation7], %s255
        %p257 = pneg %p85
        %p258 = pneg %p82
        %p259 = pneg %p111
        %p260 = pneg %p108
        %p261 = scmp.lt.s32.totalorder %s26, 1
        %s262 = scalar_select %p261, %s26, 1
        %s263 = smul.addr %s262, 8
        %s264 = scalar_lea.vmem %s2, %s263
        %p265 = pneg %p137
        %p266 = pneg %p134
        %p267 = scmp.lt.s32.totalorder %s26, 1
        %s268 = scalar_select %p267, %s26, 1
        %s269 = smul.addr %s268, 8
        %s270 = scalar_lea.vmem %s3, %s269
        %p271 = pneg %p163
        %p272 = pneg %p160
        %p273 = scmp.lt.s32.totalorder %s26, 1
        %s274 = scalar_select %p273, %s26, 1
        %s275 = smul.addr %s274, 8
        %s276 = scalar_lea.vmem %s4, %s275
        %p277 = scmp.lt.s32.totalorder %s26, 1
        %s278 = scalar_select %p277, %s26, 1
        %s279 = smul.addr %s278, 8
        %s280 = scalar_lea.vmem %s2, %s279
        %p281 = scmp.lt.s32.totalorder %s26, 1
        %s282 = scalar_select %p281, %s26, 1
        %s283 = smul.addr %s282, 8
        %s284 = scalar_lea.vmem %s3, %s283
        %p285 = scmp.lt.s32.totalorder %s26, 1
        %s286 = scalar_select %p285, %s26, 1
        %s287 = smul.addr %s286, 8
        %s288 = scalar_lea.vmem %s4, %s287
        %p289 = scmp.eq.s32.totalorder %s27, 0
        // Predicated region
        $region37: #{tpu_custom_call.1} parent=27 // pred_check
          %p290 = pneg %p289
        $region38: #{tpu_custom_call.1} parent=27 // pred_check_branch
          %292 = sbr.rel (%p290) target = $region40
        $region39: #{tpu_custom_call.1} parent=27 // pred_region
          %vm293 = vcmask 7168
          %294 = vst.msk [vmem:[#allocation2] sm:$0xff] %vm293, 0.0
          %295 = vst.msk [vmem:[#allocation3] sm:$0xff] %vm293, -inf
          %296 = vst.msk [vmem:[#allocation4] sm:$0xff] %vm293, inf
        $region40: #{tpu_custom_call.1} parent=27 // pred_fallthru
          _
        %v297 = vld [vmem:[%s231] sm:$0xff]
        %v298 = vld [vmem:[%s240] sm:$0xff]
        %v299 = vsub.f32 %v297, %v298
        %v300 = vld [vmem:[#allocation2] sm:$0xff]
        %v301 = vmul.f32 %v299, %v299
        %302 = vadd.xlane.f32.xlu0 %v301
        %v303 = vpop.xlane.xlu0 %302
        %v304 = vadd.f32 %v300, %v303
        %vm305 = vcmask 7168
        %306 = vst.msk [vmem:[#allocation2] sm:$0xff] %vm305, %v304
        %v307 = vld [vmem:[#allocation3] sm:$0xff]
        %308 = vmax.xlane.f32.xlu0 %v297
        %v309 = vpop.xlane.xlu0 %308
        %v310 = vmax.f32 %v307, %v309
        %311 = vst.msk [vmem:[#allocation3] sm:$0xff] %vm305, %v310
        %v312 = vld [vmem:[#allocation4] sm:$0xff]
        %313 = vmin.xlane.f32.xlu0 %v297
        %v314 = vpop.xlane.xlu0 %313
        %v315 = vmin.f32 %v312, %v314
        %316 = vst.msk [vmem:[#allocation4] sm:$0xff] %vm305, %v315
        // Predicated region
        $region41: #{tpu_custom_call.1} parent=27 // pred_check
          %p317 = pneg %p289
        $region42: #{tpu_custom_call.1} parent=27 // pred_check_branch
          %319 = sbr.rel (%p317) target = $region44
        $region43: #{tpu_custom_call.1} parent=27 // pred_region
          %v320 = vld [vmem:[#allocation2] sm:$0xff]
          %321 = vst.msk [vmem:[%s280] sm:$0xff] %vm305, %v320
          %v322 = vld [vmem:[#allocation3] sm:$0xff]
          %323 = vst.msk [vmem:[%s284] sm:$0xff] %vm305, %v322
          %v324 = vld [vmem:[#allocation4] sm:$0xff]
          %325 = vst.msk [vmem:[%s288] sm:$0xff] %vm305, %v324
        $region44: #{tpu_custom_call.1} parent=27 // pred_fallthru
          _
        %p326 = scmp.lt.s32.totalorder %s26, 1
        %s327 = scalar_select %p326, %s26, 1
        %s328 = smul.addr %s327, 8
        %s329 = scalar_lea.vmem %s2, %s328
        %p330 = scmp.lt.s32.totalorder %s26, 1
        %s331 = scalar_select %p330, %s26, 1
        %s332 = smul.addr %s331, 8
        %s333 = scalar_lea.vmem %s3, %s332
        %p334 = scmp.lt.s32.totalorder %s26, 1
        %s335 = scalar_select %p334, %s26, 1
        %s336 = smul.addr %s335, 8
        %s337 = scalar_lea.vmem %s4, %s336
        // Predicated region
        $region45: #{tpu_custom_call.1} parent=27 // pred_check
          %p338 = pneg %p108
        $region46: #{tpu_custom_call.1} parent=27 // pred_check_branch
          %340 = sbr.rel (%p338) target = $region48
        $region47: #{tpu_custom_call.1} parent=27 // pred_region
          _
        $region48: #{tpu_custom_call.1} parent=27 // pred_fallthru
          _
        // Predicated region
        $region49: #{tpu_custom_call.1} parent=27 // pred_check
          %p341 = pneg %p134
        $region50: #{tpu_custom_call.1} parent=27 // pred_check_branch
          %343 = sbr.rel (%p341) target = $region52
        $region51: #{tpu_custom_call.1} parent=27 // pred_region
          _
        $region52: #{tpu_custom_call.1} parent=27 // pred_fallthru
          _
        // Predicated region
        $region53: #{tpu_custom_call.1} parent=27 // pred_check
          %p344 = pneg %p160
        $region54: #{tpu_custom_call.1} parent=27 // pred_check_branch
          %346 = sbr.rel (%p344) target = $region56
        $region55: #{tpu_custom_call.1} parent=27 // pred_region
          _
        $region56: #{tpu_custom_call.1} parent=27 // pred_fallthru
          _
      $region28: #{tpu_custom_call.1} parent=5 // pred_fallthru
        _
      %p347 = scmp.le.s32.totalorder 2, %s17
      // Predicated region
      $region57: #{tpu_custom_call.1} parent=5 // pred_check
        %p348 = pneg %p347
      $region58: #{tpu_custom_call.1} parent=5 // pred_check_branch
        %350 = sbr.rel (%p348) target = $region60
      $region59: #{tpu_custom_call.1} parent=5 // pred_region
        %s351 = ssub.s32 %s17, 2
        // Predicated region
        $region61: #{tpu_custom_call.1} parent=59 // pred_check
          %p352 = pneg %p114
        $region62: #{tpu_custom_call.1} parent=59 // pred_check_branch
          %354 = sbr.rel (%p352) target = $region64
        $region63: #{tpu_custom_call.1} parent=59 // pred_region
          %p355 = scmp.lt.s32.totalorder %s28, 1
          %s356 = scalar_select %p355, %s28, 1
          %s357 = smul.addr %s356, 8
          %s358 = scalar_lea.vmem %s2, %s357
        $region64: #{tpu_custom_call.1} parent=59 // pred_fallthru
          _
        // Predicated region
        $region65: #{tpu_custom_call.1} parent=59 // pred_check
          %p359 = pneg %p140
        $region66: #{tpu_custom_call.1} parent=59 // pred_check_branch
          %361 = sbr.rel (%p359) target = $region68
        $region67: #{tpu_custom_call.1} parent=59 // pred_region
          %p362 = scmp.lt.s32.totalorder %s28, 1
          %s363 = scalar_select %p362, %s28, 1
          %s364 = smul.addr %s363, 8
          %s365 = scalar_lea.vmem %s3, %s364
        $region68: #{tpu_custom_call.1} parent=59 // pred_fallthru
          _
        // Predicated region
        $region69: #{tpu_custom_call.1} parent=59 // pred_check
          %p366 = pneg %p166
        $region70: #{tpu_custom_call.1} parent=59 // pred_check_branch
          %368 = sbr.rel (%p366) target = $region72
        $region71: #{tpu_custom_call.1} parent=59 // pred_region
          %p369 = scmp.lt.s32.totalorder %s28, 1
          %s370 = scalar_select %p369, %s28, 1
          %s371 = smul.addr %s370, 8
          %s372 = scalar_lea.vmem %s4, %s371
        $region72: #{tpu_custom_call.1} parent=59 // pred_fallthru
          _
      $region60: #{tpu_custom_call.1} parent=5 // pred_fallthru
        _
    $region6: #{tpu_custom_call.1} parent=1 // loop_footer
      %s21 = sadd.s32 1, %s17
    $region7: #{tpu_custom_call.1} parent=1 // loop_footer_branch
      %16 = sbr.rel target = $region3
    $region8: #{tpu_custom_call.1} parent=1 // loop_exit
      _
    %373 = vsyncpa [#allocation6], 1
    %s374 = scalar_lea.sflag [#allocation6], 1
    %375 = vsyncpa %s374, 1
    %376 = vsyncpa [#allocation8], 1
    %s377 = scalar_lea.sflag [#allocation8], 1
    %378 = vsyncpa %s377, 1

</llo_original>
